<compile_context>
chip_gen: v6e
topology: v6e:2x2x1
jax: 0.10.0
libtpu: 0.0.40
codegen_flags: <defaults>
</compile_context>

<pallas_src>
import functools

import numpy as np
import jax
import jax.numpy as jnp
from jax.experimental import pallas as pl
from jax.experimental.pallas import tpu as pltpu


# ----------------------------------------------------------------------------
# Anchors (deterministic RetinaNet-style anchor generator, plain numpy "glue")
# ----------------------------------------------------------------------------
_PYRAMID_LEVELS = [3, 4, 5, 6, 7]
_STRIDES = [2 ** x for x in _PYRAMID_LEVELS]
_SIZES = [2 ** (x + 2) for x in _PYRAMID_LEVELS]
_RATIOS = np.array([0.5, 1.0, 2.0])
_SCALES = np.array([2 ** 0, 2 ** (1.0 / 3.0), 2 ** (2.0 / 3.0)])


def _generate_base_anchors(base_size, ratios, scales):
    num_anchors = len(ratios) * len(scales)
    anchors = np.zeros((num_anchors, 4))
    anchors[:, 2:] = base_size * np.tile(scales, (2, len(ratios))).T
    areas = anchors[:, 2] * anchors[:, 3]
    anchors[:, 2] = np.sqrt(areas / np.repeat(ratios, len(scales)))
    anchors[:, 3] = anchors[:, 2] * np.repeat(ratios, len(scales))
    anchors[:, 0::2] -= np.tile(anchors[:, 2] * 0.5, (2, 1)).T
    anchors[:, 1::2] -= np.tile(anchors[:, 3] * 0.5, (2, 1)).T
    return anchors


def _shift(feat_shape, stride, anchors):
    shift_x = (np.arange(0, feat_shape[1]) + 0.5) * stride
    shift_y = (np.arange(0, feat_shape[0]) + 0.5) * stride
    shift_x, shift_y = np.meshgrid(shift_x, shift_y)
    shifts = np.vstack(
        (shift_x.ravel(), shift_y.ravel(), shift_x.ravel(), shift_y.ravel())
    ).transpose()
    A = anchors.shape[0]
    K = shifts.shape[0]
    all_anchors = anchors.reshape((1, A, 4)) + shifts.reshape((1, K, 4)).transpose(
        (1, 0, 2)
    )
    return all_anchors.reshape((K * A, 4))


def anchors_for_image(image_hw):
    """Returns (A, 4) float32 anchors in (x1, y1, x2, y2) format."""
    image_shape = np.array(image_hw)
    all_anchors = np.zeros((0, 4), dtype=np.float32)
    for idx, p in enumerate(_PYRAMID_LEVELS):
        feat_shape = (image_shape + 2 ** p - 1) // (2 ** p)
        base = _generate_base_anchors(_SIZES[idx], _RATIOS, _SCALES)
        shifted = _shift(feat_shape, _STRIDES[idx], base)
        all_anchors = np.append(all_anchors, shifted, axis=0)
    return all_anchors.astype(np.float32)


@functools.lru_cache(maxsize=8)
def _anchor_planes_cached(image_hw, batch):
    """Precompute static anchor decode params as lane/sublane-dense slabs.

    Returns (planes, A, A_pad) where planes is float32 (4, batch*A_pad//128, 128)
    with plane order (cx, cy, w, h), tiled over the batch (pad anchors are zero).
    """
    anchors = anchors_for_image(image_hw)          # (A, 4) float32
    A = anchors.shape[0]
    A_pad = ((A + 127) // 128) * 128
    x1, y1, x2, y2 = anchors[:, 0], anchors[:, 1], anchors[:, 2], anchors[:, 3]
    w = x2 - x1
    h = y2 - y1
    cx = x1 + np.float32(0.5) * w
    cy = y1 + np.float32(0.5) * h
    planes = np.zeros((4, A_pad), dtype=np.float32)
    planes[0, :A] = cx
    planes[1, :A] = cy
    planes[2, :A] = w
    planes[3, :A] = h
    tiled = np.tile(planes, (1, batch))            # (4, batch*A_pad): [b0 | b1 | ...]
    return tiled.reshape(4, batch * A_pad // 128, 128), A, A_pad


# ----------------------------------------------------------------------------
# Pallas kernel: fused regress_anchors + clip_anchors on (4, rows, 128) slabs
# ----------------------------------------------------------------------------
def _decode_clip_kernel(anc_ref, reg_ref, out_ref, *, img_h, img_w):
    # anc_ref: (4, R, 128) planes (cx, cy, w, h)        [static anchor decode]
    # reg_ref: (4, R, 128) planes (dx, dy, dw, dh)      [raw regression logits]
    # out_ref: (4, R, 128) planes (x1, y1, x2, y2)
    cx = anc_ref[0, :, :]
    cy = anc_ref[1, :, :]
    w = anc_ref[2, :, :]
    h = anc_ref[3, :, :]

    # std = [0.1, 0.1, 0.2, 0.2] applied per coordinate plane.
    dx = reg_ref[0, :, :] * 0.1
    dy = reg_ref[1, :, :] * 0.1
    dw = reg_ref[2, :, :] * 0.2
    dh = reg_ref[3, :, :] * 0.2

    pred_cx = cx + dx * w
    pred_cy = cy + dy * h
    half_w = 0.5 * (jnp.exp(dw) * w)
    half_h = 0.5 * (jnp.exp(dh) * h)

    # regress_anchors clamp(x1, min=0) and clip_anchors clamps fused (duplicate
    # clamp on x1 removed); x2/y2 only get the max-side clip, matching the module.
    out_ref[0, :, :] = jnp.maximum(pred_cx - half_w, 0.0)
    out_ref[1, :, :] = jnp.maximum(pred_cy - half_h, 0.0)
    out_ref[2, :, :] = jnp.minimum(pred_cx + half_w, img_w)
    out_ref[3, :, :] = jnp.minimum(pred_cy + half_h, img_h)


# 4 * 1024 * 128 * 4B = 2 MiB per operand block; 3 operands x 2 pipeline buffers
# = 12 MiB, inside the scoped-VMEM default on v5e/v6e/v7x.
_ROW_TILE = 1024


def regress_and_clip(anchor_planes, reg_planes, img_h, img_w):
    """anchor_planes/reg_planes: (4, R, 128) f32 -> (4, R, 128) f32 boxes."""
    four, R, L = reg_planes.shape
    assert four == 4 and L == 128
    kernel = functools.partial(
        _decode_clip_kernel, img_h=float(img_h), img_w=float(img_w)
    )

    if R <= _ROW_TILE:
        # Small case: single block, no grid -> one DMA in, one DMA out, no
        # per-grid-step overhead (the grid over B was pure overhead at this size).
        return pl.pallas_call(
            kernel,
            out_shape=jax.ShapeDtypeStruct((4, R, L), jnp.float32),
            in_specs=[
                pl.BlockSpec((4, R, L), lambda: (0, 0, 0)),
                pl.BlockSpec((4, R, L), lambda: (0, 0, 0)),
            ],
            out_specs=pl.BlockSpec((4, R, L), lambda: (0, 0, 0)),
        )(anchor_planes, reg_planes)

    # Large-A case: tile the row axis with a *parallel* grid (shards across both
    # TensorCores on v7x; on v5e/v6e it is a sequential pipeline of large blocks).
    r_pad = ((R + _ROW_TILE - 1) // _ROW_TILE) * _ROW_TILE
    if r_pad != R:
        pad = ((0, 0), (0, r_pad - R), (0, 0))
        anchor_planes = jnp.pad(anchor_planes, pad)
        reg_planes = jnp.pad(reg_planes, pad)
    out = pl.pallas_call(
        kernel,
        out_shape=jax.ShapeDtypeStruct((4, r_pad, L), jnp.float32),
        grid=(r_pad // _ROW_TILE,),
        in_specs=[
            pl.BlockSpec((4, _ROW_TILE, L), lambda i: (0, i, 0)),
            pl.BlockSpec((4, _ROW_TILE, L), lambda i: (0, i, 0)),
        ],
        out_specs=pl.BlockSpec((4, _ROW_TILE, L), lambda i: (0, i, 0)),
        compiler_params=pltpu.CompilerParams(dimension_semantics=("parallel",)),
    )(anchor_planes, reg_planes)
    return out[:, :R, :]


# ----------------------------------------------------------------------------
# Host-side NMS (torchvision semantics) and the full forward
# ----------------------------------------------------------------------------
def nms_numpy(boxes, scores, iou_threshold):
    if boxes.shape[0] == 0:
        return np.zeros((0,), dtype=np.int64)
    x1, y1, x2, y2 = boxes[:, 0], boxes[:, 1], boxes[:, 2], boxes[:, 3]
    areas = (x2 - x1) * (y2 - y1)
    order = scores.argsort()[::-1]
    keep = []
    while order.size > 0:
        i = order[0]
        keep.append(i)
        xx1 = np.maximum(x1[i], x1[order[1:]])
        yy1 = np.maximum(y1[i], y1[order[1:]])
        xx2 = np.minimum(x2[i], x2[order[1:]])
        yy2 = np.minimum(y2[i], y2[order[1:]])
        w = np.maximum(0.0, xx2 - xx1)
        h = np.maximum(0.0, yy2 - yy1)
        inter = w * h
        iou = inter / (areas[i] + areas[order[1:]] - inter)
        inds = np.where(iou <= iou_threshold)[0]
        order = order[inds + 1]
    return np.asarray(keep, dtype=np.int64)


def transformer_forward(image, cls_pred, reg_pred):
    """x = [image, cls_pred, reg_pred] -> [scores_ret, cls_ret, boxes_ret]."""
    B = image.shape[0]
    H, W = int(image.shape[2]), int(image.shape[3])

    # Static anchor decode precomputed on host (constant across batches/calls).
    anchor_planes_np, A, A_pad = _anchor_planes_cached((H, W), B)
    assert reg_pred.shape == (B, 4, A)
    R = B * A_pad // 128

    # Input prep: lane-pad the anchor axis to a multiple of 128 and present the
    # regression logits as coordinate planes of lane/sublane-dense (R, 128) slabs.
    reg = jnp.asarray(reg_pred, jnp.float32)
    if A_pad != A:
        reg = jnp.pad(reg, ((0, 0), (0, 0), (0, A_pad - A)))
    reg_planes = jnp.transpose(reg, (1, 0, 2)).reshape(4, R, 128)
    anchor_planes = jnp.asarray(anchor_planes_np)

    out_planes = regress_and_clip(anchor_planes, reg_planes, H, W)  # (4, R, 128)
    out_planes = jax.block_until_ready(out_planes)

    # Host-side layout back to (B, A, 4): numpy reshape/transpose are views; the
    # pad anchors are sliced off before NMS so they never enter the candidate set.
    boxes_np = np.asarray(out_planes).reshape(4, B, A_pad)
    boxes_np = np.transpose(boxes_np, (1, 2, 0))[:, :A, :]          # (B, A, 4)
    cls_np = np.asarray(cls_pred)

    # TODO(synk): the >0.05 score pre-filter + per-class NMS produce variable-length
    # outputs; on-device candidate compaction has no clean Pallas equivalent, so it
    # stays host-side in numpy with exact torchvision-NMS semantics.
    scores_ret = [np.zeros((0,), np.float32) for _ in range(B)]
    cls_ret = [np.zeros((0,), np.float32) for _ in range(B)]
    boxes_ret = [np.zeros((0, 4), np.float32) for _ in range(B)]
    for b in range(B):
        for i in range(cls_np.shape[1]):
            scores = np.squeeze(cls_np[b, i, :])
            over = scores > 0.05
            if over.sum() == 0:
                continue
            sc = scores[over]
            bx = boxes_np[b, over, :]
            keep = nms_numpy(bx, sc, 0.5)
            scores_ret[b] = np.concatenate((scores_ret[b], sc[keep]))
            cls_ret[b] = np.concatenate(
                (cls_ret[b], np.full((keep.shape[0],), i, dtype=np.float32))
            )
            boxes_ret[b] = np.concatenate((boxes_ret[b], bx[keep]), axis=0)
    return [scores_ret, cls_ret, boxes_ret]


if __name__ == "__main__":
    key = jax.random.PRNGKey(0)
    k1, k2, k3 = jax.random.split(key, 3)

    B, C, H, W = 2, 3, 64, 64
    num_classes = 4
    A = anchors_for_image((H, W)).shape[0]   # 774 anchors for 64x64

    image = jax.random.normal(k1, (B, C, H, W), dtype=jnp.float32)
    cls_pred = jax.random.uniform(k2, (B, num_classes, A), dtype=jnp.float32)
    reg_pred = 0.5 * jax.random.normal(k3, (B, 4, A), dtype=jnp.float32)

    out = transformer_forward(image, cls_pred, reg_pred)
    # Results are already host-side numpy (blocked on the Pallas output above).
    _ = [np.asarray(v) for group in out for v in group]
    print("KERNEL_OK")
</pallas_src>

<mosaic_0001>
module attributes {stable_mosaic.version = 11 : i64} {
  func.func @_decode_clip_kernel(%arg0: memref<4x14x128xf32, #tpu.memory_space<vmem>>, %arg1: memref<4x14x128xf32, #tpu.memory_space<vmem>>, %arg2: memref<4x14x128xf32, #tpu.memory_space<vmem>>) attributes {dimension_semantics = [], scalar_prefetch = 0 : i64, scratch_operands = 0 : i64, tpu.core_type = #tpu.core_type<tc>} {
    %c0 = arith.constant 0 : index
    %c0_0 = arith.constant 0 : index
    %c0_1 = arith.constant 0 : index
    %0 = vector.load %arg0[%c0, %c0_0, %c0_1] : memref<4x14x128xf32, #tpu.memory_space<vmem>>, vector<1x14x128xf32>
    %1 = vector.shape_cast %0 : vector<1x14x128xf32> to vector<14x128xf32>
    %c1 = arith.constant 1 : index
    %c0_2 = arith.constant 0 : index
    %c0_3 = arith.constant 0 : index
    %2 = vector.load %arg0[%c1, %c0_2, %c0_3] : memref<4x14x128xf32, #tpu.memory_space<vmem>>, vector<1x14x128xf32>
    %3 = vector.shape_cast %2 : vector<1x14x128xf32> to vector<14x128xf32>
    %c2 = arith.constant 2 : index
    %c0_4 = arith.constant 0 : index
    %c0_5 = arith.constant 0 : index
    %4 = vector.load %arg0[%c2, %c0_4, %c0_5] : memref<4x14x128xf32, #tpu.memory_space<vmem>>, vector<1x14x128xf32>
    %5 = vector.shape_cast %4 : vector<1x14x128xf32> to vector<14x128xf32>
    %c3 = arith.constant 3 : index
    %c0_6 = arith.constant 0 : index
    %c0_7 = arith.constant 0 : index
    %6 = vector.load %arg0[%c3, %c0_6, %c0_7] : memref<4x14x128xf32, #tpu.memory_space<vmem>>, vector<1x14x128xf32>
    %7 = vector.shape_cast %6 : vector<1x14x128xf32> to vector<14x128xf32>
    %c0_8 = arith.constant 0 : index
    %c0_9 = arith.constant 0 : index
    %c0_10 = arith.constant 0 : index
    %8 = vector.load %arg1[%c0_8, %c0_9, %c0_10] : memref<4x14x128xf32, #tpu.memory_space<vmem>>, vector<1x14x128xf32>
    %9 = vector.shape_cast %8 : vector<1x14x128xf32> to vector<14x128xf32>
    %cst = arith.constant 1.000000e-01 : f32
    %10 = vector.broadcast %cst : f32 to vector<14x128xf32>
    %11 = arith.mulf %9, %10 : vector<14x128xf32>
    %c1_11 = arith.constant 1 : index
    %c0_12 = arith.constant 0 : index
    %c0_13 = arith.constant 0 : index
    %12 = vector.load %arg1[%c1_11, %c0_12, %c0_13] : memref<4x14x128xf32, #tpu.memory_space<vmem>>, vector<1x14x128xf32>
    %13 = vector.shape_cast %12 : vector<1x14x128xf32> to vector<14x128xf32>
    %cst_14 = arith.constant 1.000000e-01 : f32
    %14 = vector.broadcast %cst_14 : f32 to vector<14x128xf32>
    %15 = arith.mulf %13, %14 : vector<14x128xf32>
    %c2_15 = arith.constant 2 : index
    %c0_16 = arith.constant 0 : index
    %c0_17 = arith.constant 0 : index
    %16 = vector.load %arg1[%c2_15, %c0_16, %c0_17] : memref<4x14x128xf32, #tpu.memory_space<vmem>>, vector<1x14x128xf32>
    %17 = vector.shape_cast %16 : vector<1x14x128xf32> to vector<14x128xf32>
    %cst_18 = arith.constant 2.000000e-01 : f32
    %18 = vector.broadcast %cst_18 : f32 to vector<14x128xf32>
    %19 = arith.mulf %17, %18 : vector<14x128xf32>
    %c3_19 = arith.constant 3 : index
    %c0_20 = arith.constant 0 : index
    %c0_21 = arith.constant 0 : index
    %20 = vector.load %arg1[%c3_19, %c0_20, %c0_21] : memref<4x14x128xf32, #tpu.memory_space<vmem>>, vector<1x14x128xf32>
    %21 = vector.shape_cast %20 : vector<1x14x128xf32> to vector<14x128xf32>
    %cst_22 = arith.constant 2.000000e-01 : f32
    %22 = vector.broadcast %cst_22 : f32 to vector<14x128xf32>
    %23 = arith.mulf %21, %22 : vector<14x128xf32>
    %24 = arith.mulf %11, %5 : vector<14x128xf32>
    %25 = arith.addf %1, %24 : vector<14x128xf32>
    %26 = arith.mulf %15, %7 : vector<14x128xf32>
    %27 = arith.addf %3, %26 : vector<14x128xf32>
    %28 = math.exp %19 : vector<14x128xf32>
    %29 = arith.mulf %28, %5 : vector<14x128xf32>
    %cst_23 = arith.constant 5.000000e-01 : f32
    %30 = vector.broadcast %cst_23 : f32 to vector<14x128xf32>
    %31 = arith.mulf %30, %29 : vector<14x128xf32>
    %32 = math.exp %23 : vector<14x128xf32>
    %33 = arith.mulf %32, %7 : vector<14x128xf32>
    %cst_24 = arith.constant 5.000000e-01 : f32
    %34 = vector.broadcast %cst_24 : f32 to vector<14x128xf32>
    %35 = arith.mulf %34, %33 : vector<14x128xf32>
    %36 = arith.subf %25, %31 : vector<14x128xf32>
    %cst_25 = arith.constant 0.000000e+00 : f32
    %37 = vector.broadcast %cst_25 : f32 to vector<14x128xf32>
    %38 = arith.maximumf %36, %37 : vector<14x128xf32>
    %c0_26 = arith.constant 0 : index
    %c0_27 = arith.constant 0 : index
    %c0_28 = arith.constant 0 : index
    %39 = vector.load %arg2[%c0_26, %c0_27, %c0_28] : memref<4x14x128xf32, #tpu.memory_space<vmem>>, vector<1x14x128xf32>
    %40 = vector.shape_cast %39 : vector<1x14x128xf32> to vector<14x128xf32>
    %41 = vector.shape_cast %38 : vector<14x128xf32> to vector<1x14x128xf32>
    tpu.vector_store %arg2[%c0_26, %c0_27, %c0_28], %41 {strides = array<i32>} : memref<4x14x128xf32, #tpu.memory_space<vmem>>, vector<1x14x128xf32>,
    %42 = arith.subf %27, %35 : vector<14x128xf32>
    %cst_29 = arith.constant 0.000000e+00 : f32
    %43 = vector.broadcast %cst_29 : f32 to vector<14x128xf32>
    %44 = arith.maximumf %42, %43 : vector<14x128xf32>
    %c1_30 = arith.constant 1 : index
    %c0_31 = arith.constant 0 : index
    %c0_32 = arith.constant 0 : index
    %45 = vector.load %arg2[%c1_30, %c0_31, %c0_32] : memref<4x14x128xf32, #tpu.memory_space<vmem>>, vector<1x14x128xf32>
    %46 = vector.shape_cast %45 : vector<1x14x128xf32> to vector<14x128xf32>
    %47 = vector.shape_cast %44 : vector<14x128xf32> to vector<1x14x128xf32>
    tpu.vector_store %arg2[%c1_30, %c0_31, %c0_32], %47 {strides = array<i32>} : memref<4x14x128xf32, #tpu.memory_space<vmem>>, vector<1x14x128xf32>,
    %48 = arith.addf %25, %31 : vector<14x128xf32>
    %cst_33 = arith.constant 6.400000e+01 : f32
    %49 = vector.broadcast %cst_33 : f32 to vector<14x128xf32>
    %50 = arith.minimumf %48, %49 : vector<14x128xf32>
    %c2_34 = arith.constant 2 : index
    %c0_35 = arith.constant 0 : index
    %c0_36 = arith.constant 0 : index
    %51 = vector.load %arg2[%c2_34, %c0_35, %c0_36] : memref<4x14x128xf32, #tpu.memory_space<vmem>>, vector<1x14x128xf32>
    %52 = vector.shape_cast %51 : vector<1x14x128xf32> to vector<14x128xf32>
    %53 = vector.shape_cast %50 : vector<14x128xf32> to vector<1x14x128xf32>
    tpu.vector_store %arg2[%c2_34, %c0_35, %c0_36], %53 {strides = array<i32>} : memref<4x14x128xf32, #tpu.memory_space<vmem>>, vector<1x14x128xf32>,
    %54 = arith.addf %27, %35 : vector<14x128xf32>
    %cst_37 = arith.constant 6.400000e+01 : f32
    %55 = vector.broadcast %cst_37 : f32 to vector<14x128xf32>
    %56 = arith.minimumf %54, %55 : vector<14x128xf32>
    %c3_38 = arith.constant 3 : index
    %c0_39 = arith.constant 0 : index
    %c0_40 = arith.constant 0 : index
    %57 = vector.load %arg2[%c3_38, %c0_39, %c0_40] : memref<4x14x128xf32, #tpu.memory_space<vmem>>, vector<1x14x128xf32>
    %58 = vector.shape_cast %57 : vector<1x14x128xf32> to vector<14x128xf32>
    %59 = vector.shape_cast %56 : vector<14x128xf32> to vector<1x14x128xf32>
    tpu.vector_store %arg2[%c3_38, %c0_39, %c0_40], %59 {strides = array<i32>} : memref<4x14x128xf32, #tpu.memory_space<vmem>>, vector<1x14x128xf32>,
    return
  }
}

</mosaic_0001>

<llo_original>
// kernel: tpu_custom_call.1
$region0: #{tpu_custom_call.1}
  #allocation0 [shape = 'u32[]', space=smem, size = 0x4, offset = 0x4, fixed_abs, tag = 'smem constant byte address 0x4 - core index']
  #allocation1 [shape = 'u32[144,128]{1,0:T(1,128)}', space=vmem, size = 0x12000, scoped, tag = 'internal scratch']
  %s0 = inlined_call_operand.vmem [shape: f32[4,14,128], index: 0, kind: input, shape index: {}]
  %s1 = inlined_call_operand.vmem [shape: f32[4,14,128], index: 1, kind: input, shape index: {}]
  %s2 = inlined_call_operand.vmem [shape: f32[4,14,128], index: 2, kind: output, shape index: {}]
  %s3 = sld [smem:[#allocation0]]
  $region18: #{tpu_custom_call.1} parent=0
    _
  %s5 = ssub.s32 1, %s3
  %s6 = scalar_select 0, %s5, %s3
  // Predicated region
  $region2: #{tpu_custom_call.1} parent=0 // pred_check
    _
  $region3: #{tpu_custom_call.1} parent=0 // pred_check_branch
    %8 = sbr.rel (0) target = $region5
  $region4: #{tpu_custom_call.1} parent=0 // pred_region
    _
  $region5: #{tpu_custom_call.1} parent=0 // pred_fallthru
    _
  // Predicated region
  $region6: #{tpu_custom_call.1} parent=0 // pred_check
    _
  $region7: #{tpu_custom_call.1} parent=0 // pred_check_branch
    %10 = sbr.rel (0) target = $region9
  $region8: #{tpu_custom_call.1} parent=0 // pred_region
    _
  $region9: #{tpu_custom_call.1} parent=0 // pred_fallthru
    _
  %v11 = vld [vmem:[%s0] sm:$0xff]
  %v12 = vld [vmem:[%s0 + $0x8] sm:$0x3f]
  %s13 = scalar_lea.vmem %s0, 16
  %v14 = vld [vmem:[%s13] sm:$0xff]
  %v15 = vld [vmem:[%s13 + $0x8] sm:$0x3f]
  %s16 = scalar_lea.vmem %s0, 32
  %v17 = vld [vmem:[%s16] sm:$0xff]
  %v18 = vld [vmem:[%s16 + $0x8] sm:$0x3f]
  %s19 = scalar_lea.vmem %s0, 48
  %v20 = vld [vmem:[%s19] sm:$0xff]
  %v21 = vld [vmem:[%s19 + $0x8] sm:$0x3f]
  %v22 = vld [vmem:[%s1] sm:$0xff]
  %v23 = vld [vmem:[%s1 + $0x8] sm:$0x3f]
  %v24 = vmul.f32 %v22, 0.1
  %v25 = vmul.f32 %v23, 0.1
  %s26 = scalar_lea.vmem %s1, 16
  %v27 = vld [vmem:[%s26] sm:$0xff]
  %v28 = vld [vmem:[%s26 + $0x8] sm:$0x3f]
  %v29 = vmul.f32 %v27, 0.1
  %v30 = vmul.f32 %v28, 0.1
  %s31 = scalar_lea.vmem %s1, 32
  %v32 = vld [vmem:[%s31] sm:$0xff]
  %v33 = vld [vmem:[%s31 + $0x8] sm:$0x3f]
  %v34 = vmul.f32 %v32, 0.2
  %v35 = vmul.f32 %v33, 0.2
  %s36 = scalar_lea.vmem %s1, 48
  %v37 = vld [vmem:[%s36] sm:$0xff]
  %v38 = vld [vmem:[%s36 + $0x8] sm:$0x3f]
  %v39 = vmul.f32 %v37, 0.2
  %v40 = vmul.f32 %v38, 0.2
  %v41 = vmul.f32 %v24, %v17
  %v42 = vmul.f32 %v25, %v18
  %v43 = vadd.f32 %v11, %v41
  %v44 = vadd.f32 %v12, %v42
  %v45 = vmul.f32 %v29, %v20
  %v46 = vmul.f32 %v30, %v21
  %v47 = vadd.f32 %v14, %v45
  %v48 = vadd.f32 %v15, %v46
  %v49 = vmul.f32 %v34, 1.442695
  %v50 = vpow.pop %v49
  %v51 = vmul.f32 %v35, 1.442695
  %v52 = vpow.pop %v51
  %v53 = vmul.f32 %v50, %v17
  %v54 = vmul.f32 %v52, %v18
  %v55 = vmul.f32 %v53, 0.5
  %v56 = vmul.f32 %v54, 0.5
  %v57 = vmul.f32 %v39, 1.442695
  %v58 = vpow.pop %v57
  %v59 = vmul.f32 %v40, 1.442695
  %v60 = vpow.pop %v59
  %v61 = vmul.f32 %v58, %v20
  %v62 = vmul.f32 %v60, %v21
  %v63 = vmul.f32 %v61, 0.5
  %v64 = vmul.f32 %v62, 0.5
  %v65 = vsub.f32 %v43, %v55
  %v66 = vsub.f32 %v44, %v56
  %v67 = vmax.f32 %v65, 0.0
  %v68 = vmax.f32 %v66, 0.0
  %69 = vst [vmem:[%s2] sm:$0xff] %v67
  %70 = vst [vmem:[%s2 + $0x8] sm:$0x3f] %v68
  %v71 = vsub.f32 %v47, %v63
  %v72 = vsub.f32 %v48, %v64
  %v73 = vmax.f32 %v71, 0.0
  %v74 = vmax.f32 %v72, 0.0
  %s75 = scalar_lea.vmem %s2, 16
  %76 = vst [vmem:[%s75] sm:$0xff] %v73
  %77 = vst [vmem:[%s75 + $0x8] sm:$0x3f] %v74
  %v78 = vadd.f32 %v43, %v55
  %v79 = vadd.f32 %v44, %v56
  %v80 = vmin.f32 %v78, 64.0
  %v81 = vmin.f32 %v79, 64.0
  %s82 = scalar_lea.vmem %s2, 32
  %83 = vst [vmem:[%s82] sm:$0xff] %v80
  %84 = vst [vmem:[%s82 + $0x8] sm:$0x3f] %v81
  %v85 = vadd.f32 %v47, %v63
  %v86 = vadd.f32 %v48, %v64
  %v87 = vmin.f32 %v85, 64.0
  %v88 = vmin.f32 %v86, 64.0
  %s89 = scalar_lea.vmem %s2, 48
  %90 = vst [vmem:[%s89] sm:$0xff] %v87
  %91 = vst [vmem:[%s89 + $0x8] sm:$0x3f] %v88
  // Predicated region
  $region10: #{tpu_custom_call.1} parent=0 // pred_check
    _
  $region11: #{tpu_custom_call.1} parent=0 // pred_check_branch
    %93 = sbr.rel (0) target = $region13
  $region12: #{tpu_custom_call.1} parent=0 // pred_region
    _
  $region13: #{tpu_custom_call.1} parent=0 // pred_fallthru
    _
  // Predicated region
  $region14: #{tpu_custom_call.1} parent=0 // pred_check
    _
  $region15: #{tpu_custom_call.1} parent=0 // pred_check_branch
    %95 = sbr.rel (0) target = $region17
  $region16: #{tpu_custom_call.1} parent=0 // pred_region
    _
  $region17: #{tpu_custom_call.1} parent=0 // pred_fallthru
    _

</llo_original>
